<compile_context>
chip_gen: v7x
topology: tpu7x:2x2x1
jax: 0.10.0
libtpu: 0.0.40
codegen_flags: <defaults>
</compile_context>

<pallas_src>
import functools

import jax
import jax.numpy as jnp
from jax.experimental import pallas as pl
from jax.experimental.pallas import tpu as pltpu

HIDDEN = 64


def _round_up(x, m):
    return (x + m - 1) // m * m


def cvae_forward_kernel(
    xc_ref, eps_ref,
    w1_ref, b1_ref,
    w2_ref, b2_ref,
    w3_ref, b3_ref,
    wmv_ref, bmv_ref,
    wd1z_ref, bd1_ref,
    wd2_ref, bd2_ref,
    wd3_ref, bd3_ref,
    out_ref,
    *, hidden, latent_dim,
):
    f32 = jnp.float32
    bf16 = jnp.bfloat16

    xc = xc_ref[...]                     # [TB, D+C] bf16  (x | one-hot cond)
    eps = eps_ref[...]                   # [TB, L] f32

    # Fused first matmul: columns [0:H]  -> encoder layer 1 (x|c) @ W_enc1
    #                     columns [H:2H] -> decoder layer-1 cond term c @ Wd1_c
    t = jnp.dot(xc, w1_ref[...], preferred_element_type=f32)      # [TB, 2H] f32
    h = jnp.maximum(t[:, :hidden] + b1_ref[...], 0.0)
    cond_d1 = t[:, hidden:]

    # Encoder layers 2, 3.
    h = jnp.maximum(
        jnp.dot(h.astype(bf16), w2_ref[...], preferred_element_type=f32)
        + b2_ref[...], 0.0)
    h = jnp.maximum(
        jnp.dot(h.astype(bf16), w3_ref[...], preferred_element_type=f32)
        + b3_ref[...], 0.0)

    # Fused mean|logvar heads.
    mv = jnp.dot(h.astype(bf16), wmv_ref[...], preferred_element_type=f32) + bmv_ref[...]
    mu = mv[:, :latent_dim]
    logvar = mv[:, latent_dim:]

    # Reparameterization: z = mu + eps * exp(0.5 * logvar)   (f32, EUP exp)
    z = mu + eps * jnp.exp(0.5 * logvar)

    # Decoder.
    d = jnp.maximum(
        jnp.dot(z.astype(bf16), wd1z_ref[...], preferred_element_type=f32)
        + cond_d1 + bd1_ref[...], 0.0)
    d = jnp.maximum(
        jnp.dot(d.astype(bf16), wd2_ref[...], preferred_element_type=f32)
        + bd2_ref[...], 0.0)
    logits = jnp.dot(d.astype(bf16), wd3_ref[...], preferred_element_type=f32) + bd3_ref[...]
    recon = jax.nn.sigmoid(logits)

    # Single lane-dense output slab: [recon | mean | logvar].
    out_ref[...] = jnp.concatenate([recon, mv], axis=-1)


def init_cvae_params(key, input_dim, num_categories, latent_dim, hidden=HIDDEN):
    """PyTorch-style uniform(+-1/sqrt(fan_in)) init; weights are [in, out]."""
    def linear(k, fan_in, fan_out):
        kw, kb = jax.random.split(k)
        bound = float(fan_in) ** -0.5
        w = jax.random.uniform(kw, (fan_in, fan_out), jnp.float32, -bound, bound)
        b = jax.random.uniform(kb, (1, fan_out), jnp.float32, -bound, bound)
        return w, b

    keys = jax.random.split(key, 8)
    w1, b1 = linear(keys[0], input_dim + num_categories, hidden)
    w2, b2 = linear(keys[1], hidden, hidden)
    w3, b3 = linear(keys[2], hidden, hidden)
    wm, bm = linear(keys[3], hidden, latent_dim)
    wv, bv = linear(keys[4], hidden, latent_dim)
    wd1, bd1 = linear(keys[5], latent_dim + num_categories, hidden)
    wd2, bd2 = linear(keys[6], hidden, hidden)
    wd3, bd3 = linear(keys[7], hidden, input_dim)
    return dict(w1=w1, b1=b1, w2=w2, b2=b2, w3=w3, b3=b3, wm=wm, bm=bm,
                wv=wv, bv=bv, wd1=wd1, bd1=bd1, wd2=wd2, bd2=bd2,
                wd3=wd3, bd3=bd3)


def pack_cvae_params(p, input_dim, num_categories, latent_dim, hidden=HIDDEN):
    """Kernel layout: bf16 weights (f32 biases), fused first layer and heads."""
    # Fused first-layer weight [D+C, 2H]:
    #   cols [0:H]   = encoder layer-1 weight (x and cond rows)
    #   cols [H:2H]  = decoder layer-1 cond rows (x rows are zero)
    w1_big = jnp.zeros((input_dim + num_categories, 2 * hidden), jnp.float32)
    w1_big = w1_big.at[:, :hidden].set(p["w1"])
    w1_big = w1_big.at[input_dim:, hidden:].set(p["wd1"][latent_dim:])

    wmv = jnp.concatenate([p["wm"], p["wv"]], axis=1)
    bmv = jnp.concatenate([p["bm"], p["bv"]], axis=1)

    bf = lambda a: a.astype(jnp.bfloat16)
    return dict(
        w1=bf(w1_big), b1=p["b1"],
        w2=bf(p["w2"]), b2=p["b2"],
        w3=bf(p["w3"]), b3=p["b3"],
        wmv=bf(wmv), bmv=bmv,
        wd1z=bf(p["wd1"][:latent_dim]), bd1=p["bd1"],
        wd2=bf(p["wd2"]), bd2=p["bd2"],
        wd3=bf(p["wd3"]), bd3=p["bd3"],
    )


@functools.partial(jax.jit, static_argnames=("block_batch",))
def cvae_forward(x, cond, eps, packed, *, block_batch=512):
    B, D = x.shape
    C = cond.shape[1]
    L = eps.shape[1]
    H = packed["w2"].shape[0]

    xc = jnp.concatenate([x, cond], axis=1).astype(jnp.bfloat16)
    eps = eps.astype(jnp.float32)

    # Batch tile: biggest reasonable tile, padded so the grid divides evenly.
    tb = min(block_batch, _round_up(B, 8))
    bp = _round_up(B, tb)
    if bp != B:
        xc = jnp.pad(xc, ((0, bp - B), (0, 0)))
        eps = jnp.pad(eps, ((0, bp - B), (0, 0)))
    grid = (bp // tb,)

    def row_spec(width):
        return pl.BlockSpec((tb, width), lambda i: (i, 0))

    def const_spec(arr):
        # Full-extent block, constant index_map -> weight stays resident in VMEM.
        return pl.BlockSpec(arr.shape, lambda i: (0, 0))

    weights = (
        packed["w1"], packed["b1"],
        packed["w2"], packed["b2"],
        packed["w3"], packed["b3"],
        packed["wmv"], packed["bmv"],
        packed["wd1z"], packed["bd1"],
        packed["wd2"], packed["bd2"],
        packed["wd3"], packed["bd3"],
    )

    kernel = functools.partial(cvae_forward_kernel, hidden=H, latent_dim=L)

    out = pl.pallas_call(
        kernel,
        out_shape=jax.ShapeDtypeStruct((bp, D + 2 * L), jnp.float32),
        grid=grid,
        in_specs=[row_spec(D + C), row_spec(L)] + [const_spec(w) for w in weights],
        out_specs=pl.BlockSpec((tb, D + 2 * L), lambda i: (i, 0)),
        compiler_params=pltpu.CompilerParams(
            dimension_semantics=("parallel",),
            vmem_limit_bytes=32 * 1024 * 1024,
        ),
    )(xc, eps, *weights)

    out = out[:B]
    recon = out[:, :D]
    mean = out[:, D:D + L]
    logvar = out[:, D + L:]
    return recon, mean, logvar


def cvae_forward_ref(x, cond, eps, packed, latent_dim):
    """Pure-JAX reference with the same bf16 cast points / f32 accumulation."""
    bf16, f32 = jnp.bfloat16, jnp.float32
    H = packed["w2"].shape[0]
    xc = jnp.concatenate([x, cond], axis=1).astype(bf16)
    t = jnp.dot(xc, packed["w1"], preferred_element_type=f32)
    h = jnp.maximum(t[:, :H] + packed["b1"], 0.0)
    cond_d1 = t[:, H:]
    h = jnp.maximum(jnp.dot(h.astype(bf16), packed["w2"], preferred_element_type=f32)
                    + packed["b2"], 0.0)
    h = jnp.maximum(jnp.dot(h.astype(bf16), packed["w3"], preferred_element_type=f32)
                    + packed["b3"], 0.0)
    mv = jnp.dot(h.astype(bf16), packed["wmv"], preferred_element_type=f32) + packed["bmv"]
    mu, logvar = mv[:, :latent_dim], mv[:, latent_dim:]
    z = mu + eps * jnp.exp(0.5 * logvar)
    d = jnp.maximum(jnp.dot(z.astype(bf16), packed["wd1z"], preferred_element_type=f32)
                    + cond_d1 + packed["bd1"], 0.0)
    d = jnp.maximum(jnp.dot(d.astype(bf16), packed["wd2"], preferred_element_type=f32)
                    + packed["bd2"], 0.0)
    recon = jax.nn.sigmoid(jnp.dot(d.astype(bf16), packed["wd3"],
                                   preferred_element_type=f32) + packed["bd3"])
    return recon, mu, logvar


if __name__ == "__main__":
    INPUT_DIM = 32
    NUM_CATEGORIES = 10
    LATENT_DIM = 15
    BATCH = 8

    key = jax.random.PRNGKey(0)
    k_params, k_x, k_cond, k_eps = jax.random.split(key, 4)

    raw = init_cvae_params(k_params, INPUT_DIM, NUM_CATEGORIES, LATENT_DIM)
    packed = pack_cvae_params(raw, INPUT_DIM, NUM_CATEGORIES, LATENT_DIM)

    # data_input in [0, 1]; condition is a one-hot class label.
    x = jax.random.uniform(k_x, (BATCH, INPUT_DIM), jnp.float32)
    labels = jax.random.randint(k_cond, (BATCH,), 0, NUM_CATEGORIES)
    cond = jax.nn.one_hot(labels, NUM_CATEGORIES, dtype=jnp.float32)
    # torch.randn_like equivalent, drawn deterministically in the wrapper.
    eps = jax.random.normal(k_eps, (BATCH, LATENT_DIM), jnp.float32)

    recon, mean_p, logvar_p = cvae_forward(x, cond, eps, packed, block_batch=256)
    jax.block_until_ready((recon, mean_p, logvar_p))

    r_ref, m_ref, lv_ref = cvae_forward_ref(x, cond, eps, packed, LATENT_DIM)
    assert recon.shape == (BATCH, INPUT_DIM)
    assert mean_p.shape == (BATCH, LATENT_DIM)
    assert logvar_p.shape == (BATCH, LATENT_DIM)
    assert jnp.allclose(recon, r_ref, atol=2e-2), float(jnp.max(jnp.abs(recon - r_ref)))
    assert jnp.allclose(mean_p, m_ref, atol=2e-2), float(jnp.max(jnp.abs(mean_p - m_ref)))
    assert jnp.allclose(logvar_p, lv_ref, atol=2e-2), float(jnp.max(jnp.abs(logvar_p - lv_ref)))

    print("KERNEL_OK")
</pallas_src>

<mosaic_0001>
module attributes {stable_mosaic.version = 11 : i64} {
  func.func @cvae_forward_kernel(%arg0: i32, %arg1: memref<8x42xbf16, #tpu.memory_space<vmem>>, %arg2: memref<8x15xf32, #tpu.memory_space<vmem>>, %arg3: memref<42x128xbf16, #tpu.memory_space<vmem>>, %arg4: memref<1x64xf32, #tpu.memory_space<vmem>>, %arg5: memref<64x64xbf16, #tpu.memory_space<vmem>>, %arg6: memref<1x64xf32, #tpu.memory_space<vmem>>, %arg7: memref<64x64xbf16, #tpu.memory_space<vmem>>, %arg8: memref<1x64xf32, #tpu.memory_space<vmem>>, %arg9: memref<64x30xbf16, #tpu.memory_space<vmem>>, %arg10: memref<1x30xf32, #tpu.memory_space<vmem>>, %arg11: memref<15x64xbf16, #tpu.memory_space<vmem>>, %arg12: memref<1x64xf32, #tpu.memory_space<vmem>>, %arg13: memref<64x64xbf16, #tpu.memory_space<vmem>>, %arg14: memref<1x64xf32, #tpu.memory_space<vmem>>, %arg15: memref<64x32xbf16, #tpu.memory_space<vmem>>, %arg16: memref<1x32xf32, #tpu.memory_space<vmem>>, %arg17: memref<8x62xf32, #tpu.memory_space<vmem>>) attributes {dimension_semantics = [#tpu.dimension_semantics<parallel>], iteration_bounds = array<i64: 1>, scalar_prefetch = 0 : i64, scratch_operands = 0 : i64, tpu.core_type = #tpu.core_type<tc>, window_params = [{transform_indices = @transform_0, window_bounds = array<i64: 8, 42>}, {transform_indices = @transform_1, window_bounds = array<i64: 8, 15>}, {pipeline_mode = #tpu.pipeline_mode<synchronous>, transform_indices = @transform_2, window_bounds = array<i64: 42, 128>}, {pipeline_mode = #tpu.pipeline_mode<synchronous>, transform_indices = @transform_3, window_bounds = array<i64: 1, 64>}, {pipeline_mode = #tpu.pipeline_mode<synchronous>, transform_indices = @transform_4, window_bounds = array<i64: 64, 64>}, {pipeline_mode = #tpu.pipeline_mode<synchronous>, transform_indices = @transform_5, window_bounds = array<i64: 1, 64>}, {pipeline_mode = #tpu.pipeline_mode<synchronous>, transform_indices = @transform_6, window_bounds = array<i64: 64, 64>}, {pipeline_mode = #tpu.pipeline_mode<synchronous>, transform_indices = @transform_7, window_bounds = array<i64: 1, 64>}, {pipeline_mode = #tpu.pipeline_mode<synchronous>, transform_indices = @transform_8, window_bounds = array<i64: 64, 30>}, {pipeline_mode = #tpu.pipeline_mode<synchronous>, transform_indices = @transform_9, window_bounds = array<i64: 1, 30>}, {pipeline_mode = #tpu.pipeline_mode<synchronous>, transform_indices = @transform_10, window_bounds = array<i64: 15, 64>}, {pipeline_mode = #tpu.pipeline_mode<synchronous>, transform_indices = @transform_11, window_bounds = array<i64: 1, 64>}, {pipeline_mode = #tpu.pipeline_mode<synchronous>, transform_indices = @transform_12, window_bounds = array<i64: 64, 64>}, {pipeline_mode = #tpu.pipeline_mode<synchronous>, transform_indices = @transform_13, window_bounds = array<i64: 1, 64>}, {pipeline_mode = #tpu.pipeline_mode<synchronous>, transform_indices = @transform_14, window_bounds = array<i64: 64, 32>}, {pipeline_mode = #tpu.pipeline_mode<synchronous>, transform_indices = @transform_15, window_bounds = array<i64: 1, 32>}, {transform_indices = @transform_16, window_bounds = array<i64: 8, 62>}]} {
    %c0 = arith.constant 0 : index
    %c0_0 = arith.constant 0 : index
    %0 = vector.load %arg1[%c0, %c0_0] : memref<8x42xbf16, #tpu.memory_space<vmem>>, vector<8x42xbf16>
    %c0_1 = arith.constant 0 : index
    %c0_2 = arith.constant 0 : index
    %1 = vector.load %arg2[%c0_1, %c0_2] : memref<8x15xf32, #tpu.memory_space<vmem>>, vector<8x15xf32>
    %c0_3 = arith.constant 0 : index
    %c0_4 = arith.constant 0 : index
    %2 = vector.load %arg3[%c0_3, %c0_4] : memref<42x128xbf16, #tpu.memory_space<vmem>>, vector<42x128xbf16>
    %cst = arith.constant dense<0.000000e+00> : vector<8x128xf32>
    %3 = tpu.matmul %0, %2, %cst {dimension_numbers = #tpu.dot_dimension_numbers<[1], [0], [0], [1], [0, 0, 1, 1], [], []>} : vector<8x42xbf16>, vector<42x128xbf16>, vector<8x128xf32> -> vector<8x128xf32>
    %4 = vector.extract_strided_slice %3 {offsets = [0, 0], sizes = [8, 64], strides = [1, 1]} : vector<8x128xf32> to vector<8x64xf32>
    %c0_5 = arith.constant 0 : index
    %c0_6 = arith.constant 0 : index
    %5 = vector.load %arg4[%c0_5, %c0_6] : memref<1x64xf32, #tpu.memory_space<vmem>>, vector<1x64xf32>
    %6 = vector.broadcast %5 : vector<1x64xf32> to vector<8x64xf32>
    %7 = arith.addf %4, %6 : vector<8x64xf32>
    %cst_7 = arith.constant 0.000000e+00 : f32
    %8 = vector.broadcast %cst_7 : f32 to vector<8x64xf32>
    %9 = arith.maximumf %7, %8 : vector<8x64xf32>
    %10 = vector.extract_strided_slice %3 {offsets = [0, 64], sizes = [8, 64], strides = [1, 1]} : vector<8x128xf32> to vector<8x64xf32>
    %11 = arith.truncf %9 : vector<8x64xf32> to vector<8x64xbf16>
    %c0_8 = arith.constant 0 : index
    %c0_9 = arith.constant 0 : index
    %12 = vector.load %arg5[%c0_8, %c0_9] : memref<64x64xbf16, #tpu.memory_space<vmem>>, vector<64x64xbf16>
    %cst_10 = arith.constant dense<0.000000e+00> : vector<8x64xf32>
    %13 = tpu.matmul %11, %12, %cst_10 {dimension_numbers = #tpu.dot_dimension_numbers<[1], [0], [0], [1], [0, 0, 1, 1], [], []>} : vector<8x64xbf16>, vector<64x64xbf16>, vector<8x64xf32> -> vector<8x64xf32>
    %c0_11 = arith.constant 0 : index
    %c0_12 = arith.constant 0 : index
    %14 = vector.load %arg6[%c0_11, %c0_12] : memref<1x64xf32, #tpu.memory_space<vmem>>, vector<1x64xf32>
    %15 = vector.broadcast %14 : vector<1x64xf32> to vector<8x64xf32>
    %16 = arith.addf %13, %15 : vector<8x64xf32>
    %cst_13 = arith.constant 0.000000e+00 : f32
    %17 = vector.broadcast %cst_13 : f32 to vector<8x64xf32>
    %18 = arith.maximumf %16, %17 : vector<8x64xf32>
    %19 = arith.truncf %18 : vector<8x64xf32> to vector<8x64xbf16>
    %c0_14 = arith.constant 0 : index
    %c0_15 = arith.constant 0 : index
    %20 = vector.load %arg7[%c0_14, %c0_15] : memref<64x64xbf16, #tpu.memory_space<vmem>>, vector<64x64xbf16>
    %cst_16 = arith.constant dense<0.000000e+00> : vector<8x64xf32>
    %21 = tpu.matmul %19, %20, %cst_16 {dimension_numbers = #tpu.dot_dimension_numbers<[1], [0], [0], [1], [0, 0, 1, 1], [], []>} : vector<8x64xbf16>, vector<64x64xbf16>, vector<8x64xf32> -> vector<8x64xf32>
    %c0_17 = arith.constant 0 : index
    %c0_18 = arith.constant 0 : index
    %22 = vector.load %arg8[%c0_17, %c0_18] : memref<1x64xf32, #tpu.memory_space<vmem>>, vector<1x64xf32>
    %23 = vector.broadcast %22 : vector<1x64xf32> to vector<8x64xf32>
    %24 = arith.addf %21, %23 : vector<8x64xf32>
    %cst_19 = arith.constant 0.000000e+00 : f32
    %25 = vector.broadcast %cst_19 : f32 to vector<8x64xf32>
    %26 = arith.maximumf %24, %25 : vector<8x64xf32>
    %27 = arith.truncf %26 : vector<8x64xf32> to vector<8x64xbf16>
    %c0_20 = arith.constant 0 : index
    %c0_21 = arith.constant 0 : index
    %28 = vector.load %arg9[%c0_20, %c0_21] : memref<64x30xbf16, #tpu.memory_space<vmem>>, vector<64x30xbf16>
    %cst_22 = arith.constant dense<0.000000e+00> : vector<8x30xf32>
    %29 = tpu.matmul %27, %28, %cst_22 {dimension_numbers = #tpu.dot_dimension_numbers<[1], [0], [0], [1], [0, 0, 1, 1], [], []>} : vector<8x64xbf16>, vector<64x30xbf16>, vector<8x30xf32> -> vector<8x30xf32>
    %c0_23 = arith.constant 0 : index
    %c0_24 = arith.constant 0 : index
    %30 = vector.load %arg10[%c0_23, %c0_24] : memref<1x30xf32, #tpu.memory_space<vmem>>, vector<1x30xf32>
    %31 = vector.broadcast %30 : vector<1x30xf32> to vector<8x30xf32>
    %32 = arith.addf %29, %31 : vector<8x30xf32>
    %33 = vector.extract_strided_slice %32 {offsets = [0, 0], sizes = [8, 15], strides = [1, 1]} : vector<8x30xf32> to vector<8x15xf32>
    %34 = vector.extract_strided_slice %32 {offsets = [0, 15], sizes = [8, 15], strides = [1, 1]} : vector<8x30xf32> to vector<8x15xf32>
    %cst_25 = arith.constant 5.000000e-01 : f32
    %35 = vector.broadcast %cst_25 : f32 to vector<8x15xf32>
    %36 = arith.mulf %35, %34 : vector<8x15xf32>
    %37 = math.exp %36 : vector<8x15xf32>
    %38 = arith.mulf %1, %37 : vector<8x15xf32>
    %39 = arith.addf %33, %38 : vector<8x15xf32>
    %40 = arith.truncf %39 : vector<8x15xf32> to vector<8x15xbf16>
    %c0_26 = arith.constant 0 : index
    %c0_27 = arith.constant 0 : index
    %41 = vector.load %arg11[%c0_26, %c0_27] : memref<15x64xbf16, #tpu.memory_space<vmem>>, vector<15x64xbf16>
    %cst_28 = arith.constant dense<0.000000e+00> : vector<8x64xf32>
    %42 = tpu.matmul %40, %41, %cst_28 {dimension_numbers = #tpu.dot_dimension_numbers<[1], [0], [0], [1], [0, 0, 1, 1], [], []>} : vector<8x15xbf16>, vector<15x64xbf16>, vector<8x64xf32> -> vector<8x64xf32>
    %43 = arith.addf %42, %10 : vector<8x64xf32>
    %c0_29 = arith.constant 0 : index
    %c0_30 = arith.constant 0 : index
    %44 = vector.load %arg12[%c0_29, %c0_30] : memref<1x64xf32, #tpu.memory_space<vmem>>, vector<1x64xf32>
    %45 = vector.broadcast %44 : vector<1x64xf32> to vector<8x64xf32>
    %46 = arith.addf %43, %45 : vector<8x64xf32>
    %cst_31 = arith.constant 0.000000e+00 : f32
    %47 = vector.broadcast %cst_31 : f32 to vector<8x64xf32>
    %48 = arith.maximumf %46, %47 : vector<8x64xf32>
    %49 = arith.truncf %48 : vector<8x64xf32> to vector<8x64xbf16>
    %c0_32 = arith.constant 0 : index
    %c0_33 = arith.constant 0 : index
    %50 = vector.load %arg13[%c0_32, %c0_33] : memref<64x64xbf16, #tpu.memory_space<vmem>>, vector<64x64xbf16>
    %cst_34 = arith.constant dense<0.000000e+00> : vector<8x64xf32>
    %51 = tpu.matmul %49, %50, %cst_34 {dimension_numbers = #tpu.dot_dimension_numbers<[1], [0], [0], [1], [0, 0, 1, 1], [], []>} : vector<8x64xbf16>, vector<64x64xbf16>, vector<8x64xf32> -> vector<8x64xf32>
    %c0_35 = arith.constant 0 : index
    %c0_36 = arith.constant 0 : index
    %52 = vector.load %arg14[%c0_35, %c0_36] : memref<1x64xf32, #tpu.memory_space<vmem>>, vector<1x64xf32>
    %53 = vector.broadcast %52 : vector<1x64xf32> to vector<8x64xf32>
    %54 = arith.addf %51, %53 : vector<8x64xf32>
    %cst_37 = arith.constant 0.000000e+00 : f32
    %55 = vector.broadcast %cst_37 : f32 to vector<8x64xf32>
    %56 = arith.maximumf %54, %55 : vector<8x64xf32>
    %57 = arith.truncf %56 : vector<8x64xf32> to vector<8x64xbf16>
    %c0_38 = arith.constant 0 : index
    %c0_39 = arith.constant 0 : index
    %58 = vector.load %arg15[%c0_38, %c0_39] : memref<64x32xbf16, #tpu.memory_space<vmem>>, vector<64x32xbf16>
    %cst_40 = arith.constant dense<0.000000e+00> : vector<8x32xf32>
    %59 = tpu.matmul %57, %58, %cst_40 {dimension_numbers = #tpu.dot_dimension_numbers<[1], [0], [0], [1], [0, 0, 1, 1], [], []>} : vector<8x64xbf16>, vector<64x32xbf16>, vector<8x32xf32> -> vector<8x32xf32>
    %c0_41 = arith.constant 0 : index
    %c0_42 = arith.constant 0 : index
    %60 = vector.load %arg16[%c0_41, %c0_42] : memref<1x32xf32, #tpu.memory_space<vmem>>, vector<1x32xf32>
    %61 = vector.broadcast %60 : vector<1x32xf32> to vector<8x32xf32>
    %62 = arith.addf %59, %61 : vector<8x32xf32>
    %63 = arith.negf %62 : vector<8x32xf32>
    %64 = math.exp %63 : vector<8x32xf32>
    %cst_43 = arith.constant 1.000000e+00 : f32
    %65 = vector.broadcast %cst_43 : f32 to vector<8x32xf32>
    %66 = arith.addf %65, %64 : vector<8x32xf32>
    %67 = arith.divf %65, %66 : vector<8x32xf32>
    %68 = tpu.concatenate %67, %32 in 1 : vector<8x32xf32>, vector<8x30xf32> -> vector<8x62xf32>
    %c0_44 = arith.constant 0 : index
    %c0_45 = arith.constant 0 : index
    %69 = vector.load %arg17[%c0_44, %c0_45] : memref<8x62xf32, #tpu.memory_space<vmem>>, vector<8x62xf32>
    tpu.vector_store %arg17[%c0_44, %c0_45], %68 {strides = array<i32>} : memref<8x62xf32, #tpu.memory_space<vmem>>, vector<8x62xf32>,
    return
  }
  func.func @transform_0(%arg0: i32) -> (i32, i32) {
    %c0_i32 = arith.constant 0 : i32
    %c0_i32_0 = arith.constant 0 : i32
    return %arg0, %c0_i32 : i32, i32
  }
  func.func @transform_1(%arg0: i32) -> (i32, i32) {
    %c0_i32 = arith.constant 0 : i32
    %c0_i32_0 = arith.constant 0 : i32
    return %arg0, %c0_i32 : i32, i32
  }
  func.func @transform_2(%arg0: i32) -> (i32, i32) {
    %c0_i32 = arith.constant 0 : i32
    %c0_i32_0 = arith.constant 0 : i32
    %c0_i32_1 = arith.constant 0 : i32
    return %c0_i32, %c0_i32_0 : i32, i32
  }
  func.func @transform_3(%arg0: i32) -> (i32, i32) {
    %c0_i32 = arith.constant 0 : i32
    %c0_i32_0 = arith.constant 0 : i32
    %c0_i32_1 = arith.constant 0 : i32
    return %c0_i32, %c0_i32_0 : i32, i32
  }
  func.func @transform_4(%arg0: i32) -> (i32, i32) {
    %c0_i32 = arith.constant 0 : i32
    %c0_i32_0 = arith.constant 0 : i32
    %c0_i32_1 = arith.constant 0 : i32
    return %c0_i32, %c0_i32_0 : i32, i32
  }
  func.func @transform_5(%arg0: i32) -> (i32, i32) {
    %c0_i32 = arith.constant 0 : i32
    %c0_i32_0 = arith.constant 0 : i32
    %c0_i32_1 = arith.constant 0 : i32
    return %c0_i32, %c0_i32_0 : i32, i32
  }
  func.func @transform_6(%arg0: i32) -> (i32, i32) {
    %c0_i32 = arith.constant 0 : i32
    %c0_i32_0 = arith.constant 0 : i32
    %c0_i32_1 = arith.constant 0 : i32
    return %c0_i32, %c0_i32_0 : i32, i32
  }
  func.func @transform_7(%arg0: i32) -> (i32, i32) {
    %c0_i32 = arith.constant 0 : i32
    %c0_i32_0 = arith.constant 0 : i32
    %c0_i32_1 = arith.constant 0 : i32
    return %c0_i32, %c0_i32_0 : i32, i32
  }
  func.func @transform_8(%arg0: i32) -> (i32, i32) {
    %c0_i32 = arith.constant 0 : i32
    %c0_i32_0 = arith.constant 0 : i32
    %c0_i32_1 = arith.constant 0 : i32
    return %c0_i32, %c0_i32_0 : i32, i32
  }
  func.func @transform_9(%arg0: i32) -> (i32, i32) {
    %c0_i32 = arith.constant 0 : i32
    %c0_i32_0 = arith.constant 0 : i32
    %c0_i32_1 = arith.constant 0 : i32
    return %c0_i32, %c0_i32_0 : i32, i32
  }
  func.func @transform_10(%arg0: i32) -> (i32, i32) {
    %c0_i32 = arith.constant 0 : i32
    %c0_i32_0 = arith.constant 0 : i32
    %c0_i32_1 = arith.constant 0 : i32
    return %c0_i32, %c0_i32_0 : i32, i32
  }
  func.func @transform_11(%arg0: i32) -> (i32, i32) {
    %c0_i32 = arith.constant 0 : i32
    %c0_i32_0 = arith.constant 0 : i32
    %c0_i32_1 = arith.constant 0 : i32
    return %c0_i32, %c0_i32_0 : i32, i32
  }
  func.func @transform_12(%arg0: i32) -> (i32, i32) {
    %c0_i32 = arith.constant 0 : i32
    %c0_i32_0 = arith.constant 0 : i32
    %c0_i32_1 = arith.constant 0 : i32
    return %c0_i32, %c0_i32_0 : i32, i32
  }
  func.func @transform_13(%arg0: i32) -> (i32, i32) {
    %c0_i32 = arith.constant 0 : i32
    %c0_i32_0 = arith.constant 0 : i32
    %c0_i32_1 = arith.constant 0 : i32
    return %c0_i32, %c0_i32_0 : i32, i32
  }
  func.func @transform_14(%arg0: i32) -> (i32, i32) {
    %c0_i32 = arith.constant 0 : i32
    %c0_i32_0 = arith.constant 0 : i32
    %c0_i32_1 = arith.constant 0 : i32
    return %c0_i32, %c0_i32_0 : i32, i32
  }
  func.func @transform_15(%arg0: i32) -> (i32, i32) {
    %c0_i32 = arith.constant 0 : i32
    %c0_i32_0 = arith.constant 0 : i32
    %c0_i32_1 = arith.constant 0 : i32
    return %c0_i32, %c0_i32_0 : i32, i32
  }
  func.func @transform_16(%arg0: i32) -> (i32, i32) {
    %c0_i32 = arith.constant 0 : i32
    %c0_i32_0 = arith.constant 0 : i32
    return %arg0, %c0_i32 : i32, i32
  }
}

</mosaic_0001>

<llo_original>
// kernel: cvae_forward.1
$region0: #{cvae_forward.1}
  #allocation0 [shape = 'u32[]', space=smem, size = 0x4, offset = 0x4, fixed_abs, tag = 'smem constant byte address 0x4 - core index']
  #allocation1 [shape = 'u32[144,128]{1,0:T(1,128)}', space=vmem, size = 0x12000, scoped, tag = 'internal scratch']
  %s0 = inlined_call_operand.vmem [shape: bf16[8,42], index: 0, kind: input, shape index: {}]
  %s1 = inlined_call_operand.hbm [shape: f32[8,15], index: 1, kind: input, shape index: {}]
  %s2 = inlined_call_operand.vmem [shape: bf16[42,128], index: 2, kind: input, shape index: {}]
  %s3 = inlined_call_operand.vmem [shape: f32[1,64], index: 3, kind: input, shape index: {}]
  %s4 = inlined_call_operand.vmem [shape: bf16[64,64], index: 4, kind: input, shape index: {}]
  %s5 = inlined_call_operand.vmem [shape: f32[1,64], index: 5, kind: input, shape index: {}]
  %s6 = inlined_call_operand.vmem [shape: bf16[64,64], index: 6, kind: input, shape index: {}]
  %s7 = inlined_call_operand.hbm [shape: f32[1,64], index: 7, kind: input, shape index: {}]
  %s8 = inlined_call_operand.vmem [shape: bf16[64,30], index: 8, kind: input, shape index: {}]
  %s9 = inlined_call_operand.vmem [shape: f32[1,30], index: 9, kind: input, shape index: {}]
  %s10 = inlined_call_operand.vmem [shape: bf16[15,64], index: 10, kind: input, shape index: {}]
  %s11 = inlined_call_operand.hbm [shape: f32[1,64], index: 11, kind: input, shape index: {}]
  %s12 = inlined_call_operand.vmem [shape: bf16[64,64], index: 12, kind: input, shape index: {}]
  %s13 = inlined_call_operand.hbm [shape: f32[1,64], index: 13, kind: input, shape index: {}]
  %s14 = inlined_call_operand.vmem [shape: bf16[64,32], index: 14, kind: input, shape index: {}]
  %s15 = inlined_call_operand.hbm [shape: f32[1,32], index: 15, kind: input, shape index: {}]
  %s16 = inlined_call_operand.vmem [shape: f32[8,62], index: 16, kind: output, shape index: {}]
  %s17 = sld [smem:[#allocation0]]
  $region94: #{cvae_forward.1} parent=0
    _
  %s19 = ssub.s32 1, %s17
  %s20 = scalar_select 0, %s19, %s17
  $region1: #{cvae_forward.1} parent=0
    #allocation2 [shape = 'u8[4096]{0}', space=vmem, size = 0x1000, scoped, tag = 'input window, operand 1, single buffered']
    #allocation3 [shape = 's32[1]{0}', space=sflag, size = 0x4, scoped, tag = 'scoped memory for cvae_forward.1']
    #allocation4 [shape = 'u8[512]{0}', space=vmem, size = 0x400, scoped, tag = 'input window, operand 7, single buffered']
    #allocation5 [shape = 's32[1]{0}', space=sflag, size = 0x4, scoped, tag = 'scoped memory for cvae_forward.1']
    #allocation6 [shape = 'u8[512]{0}', space=vmem, size = 0x400, scoped, tag = 'input window, operand 11, single buffered']
    #allocation7 [shape = 'u8[512]{0}', space=vmem, size = 0x400, scoped, tag = 'input window, operand 13, single buffered']
    #allocation8 [shape = 's32[1]{0}', space=sflag, size = 0x4, scoped, tag = 'scoped memory for cvae_forward.1']
    #allocation9 [shape = 'u8[512]{0}', space=vmem, size = 0x400, scoped, tag = 'input window, operand 15, single buffered']
    %21 = vsyncpa [#allocation3], 0
    %22 = vsyncpa [#allocation5], 0
    %23 = vsyncpa [#allocation8], 0
    // Predicated region
    $region2: #{cvae_forward.1} parent=1 // pred_check
      _
    $region3: #{cvae_forward.1} parent=1 // pred_check_branch
      %25 = sbr.rel (0) target = $region5
    $region4: #{cvae_forward.1} parent=1 // pred_region
      _
    $region5: #{cvae_forward.1} parent=1 // pred_fallthru
      _
    // Predicated region
    $region6: #{cvae_forward.1} parent=1 // pred_check
      _
    $region7: #{cvae_forward.1} parent=1 // pred_check_branch
      %27 = sbr.rel (0) target = $region9
    $region8: #{cvae_forward.1} parent=1 // pred_region
      %s29 = ssub.s32 128, 128
      %30 = vsyncadd [#allocation3], %s29
      %s32 = sshll.u32 [#allocation2], 4
      %s33 = int_to_ptr.vmem [resolvable:$true] %s32
      %35 = dma.hbm_to_vmem [thread:$0]  %s1, 128, %s33, [#allocation3]
    $region9: #{cvae_forward.1} parent=1 // pred_fallthru
      _
    // Predicated region
    $region10: #{cvae_forward.1} parent=1 // pred_check
      _
    $region11: #{cvae_forward.1} parent=1 // pred_check_branch
      %37 = sbr.rel (0) target = $region13
    $region12: #{cvae_forward.1} parent=1 // pred_region
      _
    $region13: #{cvae_forward.1} parent=1 // pred_fallthru
      _
    // Predicated region
    $region14: #{cvae_forward.1} parent=1 // pred_check
      _
    $region15: #{cvae_forward.1} parent=1 // pred_check_branch
      %39 = sbr.rel (0) target = $region17
    $region16: #{cvae_forward.1} parent=1 // pred_region
      _
    $region17: #{cvae_forward.1} parent=1 // pred_fallthru
      _
    // Predicated region
    $region18: #{cvae_forward.1} parent=1 // pred_check
      _
    $region19: #{cvae_forward.1} parent=1 // pred_check_branch
      %41 = sbr.rel (0) target = $region21
    $region20: #{cvae_forward.1} parent=1 // pred_region
      _
    $region21: #{cvae_forward.1} parent=1 // pred_fallthru
      _
    // Predicated region
    $region22: #{cvae_forward.1} parent=1 // pred_check
      _
    $region23: #{cvae_forward.1} parent=1 // pred_check_branch
      %43 = sbr.rel (0) target = $region25
    $region24: #{cvae_forward.1} parent=1 // pred_region
      _
    $region25: #{cvae_forward.1} parent=1 // pred_fallthru
      _
    // Predicated region
    $region26: #{cvae_forward.1} parent=1 // pred_check
      _
    $region27: #{cvae_forward.1} parent=1 // pred_check_branch
      %45 = sbr.rel (0) target = $region29
    $region28: #{cvae_forward.1} parent=1 // pred_region
      _
    $region29: #{cvae_forward.1} parent=1 // pred_fallthru
      _
    // Predicated region
    $region30: #{cvae_forward.1} parent=1 // pred_check
      _
    $region31: #{cvae_forward.1} parent=1 // pred_check_branch
      %47 = sbr.rel (0) target = $region33
    $region32: #{cvae_forward.1} parent=1 // pred_region
      %s49 = ssub.s32 16, 16
      %50 = vsyncadd [#allocation5], %s49
      %s52 = sshll.u32 [#allocation4], 4
      %s53 = int_to_ptr.vmem [resolvable:$true] %s52
      %55 = dma.hbm_to_vmem [thread:$0]  %s7, 16, %s53, [#allocation5]
    $region33: #{cvae_forward.1} parent=1 // pred_fallthru
      _
    // Predicated region
    $region34: #{cvae_forward.1} parent=1 // pred_check
      _
    $region35: #{cvae_forward.1} parent=1 // pred_check_branch
      %57 = sbr.rel (0) target = $region37
    $region36: #{cvae_forward.1} parent=1 // pred_region
      _
    $region37: #{cvae_forward.1} parent=1 // pred_fallthru
      _
    // Predicated region
    $region38: #{cvae_forward.1} parent=1 // pred_check
      _
    $region39: #{cvae_forward.1} parent=1 // pred_check_branch
      %59 = sbr.rel (0) target = $region41
    $region40: #{cvae_forward.1} parent=1 // pred_region
      _
    $region41: #{cvae_forward.1} parent=1 // pred_fallthru
      _
    // Predicated region
    $region42: #{cvae_forward.1} parent=1 // pred_check
      _
    $region43: #{cvae_forward.1} parent=1 // pred_check_branch
      %61 = sbr.rel (0) target = $region45
    $region44: #{cvae_forward.1} parent=1 // pred_region
      _
    $region45: #{cvae_forward.1} parent=1 // pred_fallthru
      _
    // Predicated region
    $region46: #{cvae_forward.1} parent=1 // pred_check
      _
    $region47: #{cvae_forward.1} parent=1 // pred_check_branch
      %63 = sbr.rel (0) target = $region49
    $region48: #{cvae_forward.1} parent=1 // pred_region
      %s65 = ssub.s32 16, 16
      %66 = vsyncadd [#allocation5], %s65
      %s68 = sshll.u32 [#allocation6], 4
      %s69 = int_to_ptr.vmem [resolvable:$true] %s68
      %71 = dma.hbm_to_vmem [thread:$0]  %s11, 16, %s69, [#allocation5]
    $region49: #{cvae_forward.1} parent=1 // pred_fallthru
      _
    // Predicated region
    $region50: #{cvae_forward.1} parent=1 // pred_check
      _
    $region51: #{cvae_forward.1} parent=1 // pred_check_branch
      %73 = sbr.rel (0) target = $region53
    $region52: #{cvae_forward.1} parent=1 // pred_region
      _
    $region53: #{cvae_forward.1} parent=1 // pred_fallthru
      _
    // Predicated region
    $region54: #{cvae_forward.1} parent=1 // pred_check
      _
    $region55: #{cvae_forward.1} parent=1 // pred_check_branch
      %75 = sbr.rel (0) target = $region57
    $region56: #{cvae_forward.1} parent=1 // pred_region
      %s77 = ssub.s32 16, 16
      %78 = vsyncadd [#allocation8], %s77
      %s80 = sshll.u32 [#allocation7], 4
      %s81 = int_to_ptr.vmem [resolvable:$true] %s80
      %83 = dma.hbm_to_vmem [thread:$0]  %s13, 16, %s81, [#allocation8]
    $region57: #{cvae_forward.1} parent=1 // pred_fallthru
      _
    // Predicated region
    $region58: #{cvae_forward.1} parent=1 // pred_check
      _
    $region59: #{cvae_forward.1} parent=1 // pred_check_branch
      %85 = sbr.rel (0) target = $region61
    $region60: #{cvae_forward.1} parent=1 // pred_region
      _
    $region61: #{cvae_forward.1} parent=1 // pred_fallthru
      _
    // Predicated region
    $region62: #{cvae_forward.1} parent=1 // pred_check
      _
    $region63: #{cvae_forward.1} parent=1 // pred_check_branch
      %87 = sbr.rel (0) target = $region65
    $region64: #{cvae_forward.1} parent=1 // pred_region
      %s89 = ssub.s32 16, 16
      %90 = vsyncadd [#allocation8], %s89
      %s92 = sshll.u32 [#allocation9], 4
      %s93 = int_to_ptr.vmem [resolvable:$true] %s92
      %95 = dma.hbm_to_vmem [thread:$0]  %s15, 16, %s93, [#allocation8]
    $region65: #{cvae_forward.1} parent=1 // pred_fallthru
      _
    // Predicated region
    $region66: #{cvae_forward.1} parent=1 // pred_check
      _
    $region67: #{cvae_forward.1} parent=1 // pred_check_branch
      %97 = sbr.rel (0) target = $region69
    $region68: #{cvae_forward.1} parent=1 // pred_region
      %98 = dma.done [#allocation3], 128
    $region69: #{cvae_forward.1} parent=1 // pred_fallthru
      _
    // Predicated region
    $region70: #{cvae_forward.1} parent=1 // pred_check
      _
    $region71: #{cvae_forward.1} parent=1 // pred_check_branch
      %100 = sbr.rel (0) target = $region73
    $region72: #{cvae_forward.1} parent=1 // pred_region
      %101 = dma.done [#allocation5], 16
    $region73: #{cvae_forward.1} parent=1 // pred_fallthru
      _
    // Predicated region
    $region74: #{cvae_forward.1} parent=1 // pred_check
      _
    $region75: #{cvae_forward.1} parent=1 // pred_check_branch
      %103 = sbr.rel (0) target = $region77
    $region76: #{cvae_forward.1} parent=1 // pred_region
      %104 = dma.done [#allocation5], 16
    $region77: #{cvae_forward.1} parent=1 // pred_fallthru
      _
    // Predicated region
    $region78: #{cvae_forward.1} parent=1 // pred_check
      _
    $region79: #{cvae_forward.1} parent=1 // pred_check_branch
      %106 = sbr.rel (0) target = $region81
    $region80: #{cvae_forward.1} parent=1 // pred_region
      %107 = dma.done [#allocation8], 16
    $region81: #{cvae_forward.1} parent=1 // pred_fallthru
      _
    // Predicated region
    $region82: #{cvae_forward.1} parent=1 // pred_check
      _
    $region83: #{cvae_forward.1} parent=1 // pred_check_branch
      %109 = sbr.rel (0) target = $region85
    $region84: #{cvae_forward.1} parent=1 // pred_region
      %110 = dma.done [#allocation8], 16
    $region85: #{cvae_forward.1} parent=1 // pred_fallthru
      _
    %v112 = vld [vmem:[%s0] sm:$0xf]
    %v113 = vld [vmem:[#allocation2] sm:$0xff]
    %v114 = vld [vmem:[%s2] sm:$0xf]
    %v115 = vld [vmem:[%s2 + $0x4] sm:$0xf]
    %v116 = vld [vmem:[%s2 + $0x8] sm:$0xf]
    %v117 = vld [vmem:[%s2 + $0xc] sm:$0xf]
    %v118 = vld [vmem:[%s2 + $0x10] sm:$0xf]
    %v119 = vld [vmem:[%s2 + $0x14] sm:$0x1]
    %v126 = vunpack.c.l.b16 %v114
    %v127 = vunpack.c.l.b16 %v115
    %v128 = vunpack.c.l.b16 %v116
    %v129 = vunpack.c.l.b16 %v117
    %v130 = vunpack.c.l.b16 %v118
    %v131 = vunpack.c.l.b16 %v119
    %v132 = vpack.c.b16 %v127, %v126
    %v133 = vpack.c.b16 %v129, %v128
    %v134 = vpack.c.b16 %v131, %v130
    %vm137 = vcmask 343040
    %v139 = vsel %vm137, %v112, 0
    %vm141 = vcmask 1044480
    %v143 = vsel %vm141, %v134, 0
    %145 = vmatprep.subr.bf16.mxu0 0
    %146 = vmatpush1.bf16.msra.mxu0 %v132
    %147 = vmatprep.subr.bf16.mxu0 0
    %148 = vmatpush1.bf16.msra.mxu0 %v133
    %149 = vmatprep.subr.bf16.mxu0 0
    %150 = vmatpush1.bf16.msra.mxu0 %v143
    %151 = vmatprep.subr.bf16.mxu0 0
    %152 = vmatpush1.bf16.msra.mxu0 0
    %153 = vmatprep.subr.bf16.mxu0 0
    %154 = vmatpush1.bf16.msra.mxu0 0
    %155 = vmatprep.subr.bf16.mxu0 0
    %156 = vmatpush1.bf16.msra.mxu0 0
    %157 = vmatprep.subr.bf16.mxu0 0
    %158 = vmatpush1.bf16.msra.mxu0 0
    %159 = vmatprep.subr.bf16.mxu0 0
    %160 = vmatpush1.bf16.msra.mxu0 0
    %161 = vmatprep.subr.bf16.mxu0 0
    %162 = vmatpush1.bf16.msra.mxu0 0
    %163 = vmatprep.subr.bf16.mxu0 0
    %164 = vmatpush1.bf16.msra.mxu0 0
    %165 = vmatprep.subr.bf16.mxu0 0
    %166 = vmatpush1.bf16.msra.mxu0 0
    %167 = vmatprep.subr.bf16.mxu0 0
    %168 = vmatpush1.bf16.msra.mxu0 0
    %169 = vmatprep.subr.bf16.mxu0 0
    %170 = vmatpush1.bf16.msra.mxu0 0
    %171 = vmatprep.subr.bf16.mxu0 0
    %172 = vmatpush1.bf16.msra.mxu0 0
    %173 = vmatprep.subr.bf16.mxu0 0
    %174 = vmatpush1.bf16.msra.mxu0 0
    %175 = vmatprep.subr.bf16.mxu0 0
    %176 = vmatpush1.bf16.msra.mxu0 0
    %177 = vmatprep.mubr.bf16.mxu0 0
    %178 = vmatmul.mubr.bf16.gmra.mrb[0].mxu0 %v139
    %v179 = vpop.f32.mrb[0].mxu0
    %v180 = vadd.f32 0.0, %v179
    %v181 = vpop.f32.mrb[0].mxu0
    %v182 = vpop.f32.mrb[0].mxu0
    %v183 = vpop.f32.mrb[0].mxu0
    %184 = vdwg.mxu0
    %v185 = vld [vmem:[%s3] sm:$0x1]
    %v187 = vlaneseq
    %v188 = vshrl.u32 %v187, 7
    %v189 = vsub.s32 0, %v188
    %v190 = vrot.slane %v185, %v189
    %v192 = vadd.f32 %v180, %v190
    %v193 = vmax.f32 %v192, 0.0
    %v194 = vpack.c.bf16 %v193, %v193
    %v195 = vld [vmem:[%s4] sm:$0xf]
    %v196 = vld [vmem:[%s4 + $0x4] sm:$0xf]
    %v197 = vld [vmem:[%s4 + $0x8] sm:$0xf]
    %v198 = vld [vmem:[%s4 + $0xc] sm:$0xf]
    %v199 = vld [vmem:[%s4 + $0x10] sm:$0xf]
    %v200 = vld [vmem:[%s4 + $0x14] sm:$0xf]
    %v201 = vld [vmem:[%s4 + $0x18] sm:$0xf]
    %v202 = vld [vmem:[%s4 + $0x1c] sm:$0xf]
    %v203 = vld [vmem:[%s5] sm:$0x1]
    %v205 = vlaneseq
    %v206 = vshrl.u32 %v205, 7
    %v207 = vsub.s32 0, %v206
    %v208 = vrot.slane %v203, %v207
    %v218 = vunpack.c.l.b16 %v195
    %v219 = vunpack.c.l.b16 %v196
    %v220 = vunpack.c.l.b16 %v197
    %v221 = vunpack.c.l.b16 %v198
    %v222 = vunpack.c.l.b16 %v199
    %v223 = vunpack.c.l.b16 %v200
    %v224 = vunpack.c.l.b16 %v201
    %v225 = vunpack.c.l.b16 %v202
    %v226 = vpack.c.b16 %v219, %v218
    %v227 = vpack.c.b16 %v221, %v220
    %v228 = vpack.c.b16 %v223, %v222
    %v229 = vpack.c.b16 %v225, %v224
    %vm234 = vcmask 523264
    %v236 = vsel %vm234, %v194, 0
    %238 = vmatprep.subr.bf16.mxu0 0
    %239 = vmatpush1.bf16.msra.mxu0 %v226
    %240 = vmatprep.subr.bf16.mxu0 0
    %241 = vmatpush1.bf16.msra.mxu0 %v227
    %242 = vmatprep.subr.bf16.mxu0 0
    %243 = vmatpush1.bf16.msra.mxu0 %v228
    %244 = vmatprep.subr.bf16.mxu0 0
    %245 = vmatpush1.bf16.msra.mxu0 %v229
    %246 = vmatprep.subr.bf16.mxu0 0
    %247 = vmatpush1.bf16.msra.mxu0 0
    %248 = vmatprep.subr.bf16.mxu0 0
    %249 = vmatpush1.bf16.msra.mxu0 0
    %250 = vmatprep.subr.bf16.mxu0 0
    %251 = vmatpush1.bf16.msra.mxu0 0
    %252 = vmatprep.subr.bf16.mxu0 0
    %253 = vmatpush1.bf16.msra.mxu0 0
    %254 = vmatprep.subr.bf16.mxu0 0
    %255 = vmatpush1.bf16.msra.mxu0 0
    %256 = vmatprep.subr.bf16.mxu0 0
    %257 = vmatpush1.bf16.msra.mxu0 0
    %258 = vmatprep.subr.bf16.mxu0 0
    %259 = vmatpush1.bf16.msra.mxu0 0
    %260 = vmatprep.subr.bf16.mxu0 0
    %261 = vmatpush1.bf16.msra.mxu0 0
    %262 = vmatprep.subr.bf16.mxu0 0
    %263 = vmatpush1.bf16.msra.mxu0 0
    %264 = vmatprep.subr.bf16.mxu0 0
    %265 = vmatpush1.bf16.msra.mxu0 0
    %266 = vmatprep.subr.bf16.mxu0 0
    %267 = vmatpush1.bf16.msra.mxu0 0
    %268 = vmatprep.subr.bf16.mxu0 0
    %269 = vmatpush1.bf16.msra.mxu0 0
    %270 = vmatprep.mubr.bf16.mxu0 0
    %271 = vmatmul.mubr.bf16.gmra.mrb[0].mxu0 %v236
    %v272 = vpop.f32.mrb[0].mxu0
    %v273 = vadd.f32 %v208, %v272
    %v274 = vpop.f32.mrb[0].mxu0
    %v275 = vpop.f32.mrb[0].mxu0
    %v276 = vpop.f32.mrb[0].mxu0
    %277 = vdwg.mxu0
    %v278 = vmax.f32 %v273, 0.0
    %v279 = vpack.c.bf16 %v278, %v278
    %v280 = vld [vmem:[%s6] sm:$0xf]
    %v281 = vld [vmem:[%s6 + $0x4] sm:$0xf]
    %v282 = vld [vmem:[%s6 + $0x8] sm:$0xf]
    %v283 = vld [vmem:[%s6 + $0xc] sm:$0xf]
    %v284 = vld [vmem:[%s6 + $0x10] sm:$0xf]
    %v285 = vld [vmem:[%s6 + $0x14] sm:$0xf]
    %v286 = vld [vmem:[%s6 + $0x18] sm:$0xf]
    %v287 = vld [vmem:[%s6 + $0x1c] sm:$0xf]
    %v288 = vld [vmem:[#allocation4] sm:$0x1]
    %v290 = vlaneseq
    %v291 = vshrl.u32 %v290, 7
    %v292 = vsub.s32 0, %v291
    %v293 = vrot.slane %v288, %v292
    %v303 = vunpack.c.l.b16 %v280
    %v304 = vunpack.c.l.b16 %v281
    %v305 = vunpack.c.l.b16 %v282
    %v306 = vunpack.c.l.b16 %v283
    %v307 = vunpack.c.l.b16 %v284
    %v308 = vunpack.c.l.b16 %v285
    %v309 = vunpack.c.l.b16 %v286
    %v310 = vunpack.c.l.b16 %v287
    %v311 = vpack.c.b16 %v304, %v303
    %v312 = vpack.c.b16 %v306, %v305
    %v313 = vpack.c.b16 %v308, %v307
    %v314 = vpack.c.b16 %v310, %v309
    %v320 = vsel %vm234, %v279, 0
    %322 = vmatprep.subr.bf16.mxu0 0
    %323 = vmatpush1.bf16.msra.mxu0 %v311
    %324 = vmatprep.subr.bf16.mxu0 0
    %325 = vmatpush1.bf16.msra.mxu0 %v312
    %326 = vmatprep.subr.bf16.mxu0 0
    %327 = vmatpush1.bf16.msra.mxu0 %v313
    %328 = vmatprep.subr.bf16.mxu0 0
    %329 = vmatpush1.bf16.msra.mxu0 %v314
    %330 = vmatprep.subr.bf16.mxu0 0
    %331 = vmatpush1.bf16.msra.mxu0 0
    %332 = vmatprep.subr.bf16.mxu0 0
    %333 = vmatpush1.bf16.msra.mxu0 0
    %334 = vmatprep.subr.bf16.mxu0 0
    %335 = vmatpush1.bf16.msra.mxu0 0
    %336 = vmatprep.subr.bf16.mxu0 0
    %337 = vmatpush1.bf16.msra.mxu0 0
    %338 = vmatprep.subr.bf16.mxu0 0
    %339 = vmatpush1.bf16.msra.mxu0 0
    %340 = vmatprep.subr.bf16.mxu0 0
    %341 = vmatpush1.bf16.msra.mxu0 0
    %342 = vmatprep.subr.bf16.mxu0 0
    %343 = vmatpush1.bf16.msra.mxu0 0
    %344 = vmatprep.subr.bf16.mxu0 0
    %345 = vmatpush1.bf16.msra.mxu0 0
    %346 = vmatprep.subr.bf16.mxu0 0
    %347 = vmatpush1.bf16.msra.mxu0 0
    %348 = vmatprep.subr.bf16.mxu0 0
    %349 = vmatpush1.bf16.msra.mxu0 0
    %350 = vmatprep.subr.bf16.mxu0 0
    %351 = vmatpush1.bf16.msra.mxu0 0
    %352 = vmatprep.subr.bf16.mxu0 0
    %353 = vmatpush1.bf16.msra.mxu0 0
    %354 = vmatprep.mubr.bf16.mxu0 0
    %355 = vmatmul.mubr.bf16.gmra.mrb[0].mxu0 %v320
    %v356 = vpop.f32.mrb[0].mxu0
    %v357 = vadd.f32 %v293, %v356
    %v358 = vpop.f32.mrb[0].mxu0
    %v359 = vpop.f32.mrb[0].mxu0
    %v360 = vpop.f32.mrb[0].mxu0
    %361 = vdwg.mxu0
    %v362 = vmax.f32 %v357, 0.0
    %v363 = vpack.c.bf16 %v362, %v362
    %v364 = vld [vmem:[%s8] sm:$0xf]
    %v365 = vld [vmem:[%s8 + $0x4] sm:$0xf]
    %v366 = vld [vmem:[%s8 + $0x8] sm:$0xf]
    %v367 = vld [vmem:[%s8 + $0xc] sm:$0xf]
    %v368 = vld [vmem:[%s8 + $0x10] sm:$0xf]
    %v369 = vld [vmem:[%s8 + $0x14] sm:$0xf]
    %v370 = vld [vmem:[%s8 + $0x18] sm:$0xf]
    %v371 = vld [vmem:[%s8 + $0x1c] sm:$0xf]
    %v372 = vld [vmem:[%s9] sm:$0x1]
    %v374 = vlaneseq
    %v375 = vshrl.u32 %v374, 7
    %v376 = vsub.s32 0, %v375
    %v377 = vrot.slane %v372, %v376
    %v387 = vunpack.c.l.b16 %v364
    %v388 = vunpack.c.l.b16 %v365
    %v389 = vunpack.c.l.b16 %v366
    %v390 = vunpack.c.l.b16 %v367
    %v391 = vunpack.c.l.b16 %v368
    %v392 = vunpack.c.l.b16 %v369
    %v393 = vunpack.c.l.b16 %v370
    %v394 = vunpack.c.l.b16 %v371
    %v395 = vpack.c.b16 %v388, %v387
    %v396 = vpack.c.b16 %v390, %v389
    %v397 = vpack.c.b16 %v392, %v391
    %v398 = vpack.c.b16 %v394, %v393
    %v404 = vsel %vm234, %v363, 0
    %406 = vmatprep.subr.bf16.mxu0 0
    %407 = vmatpush1.bf16.msra.mxu0 %v395
    %408 = vmatprep.subr.bf16.mxu0 0
    %409 = vmatpush1.bf16.msra.mxu0 %v396
    %410 = vmatprep.subr.bf16.mxu0 0
    %411 = vmatpush1.bf16.msra.mxu0 %v397
    %412 = vmatprep.subr.bf16.mxu0 0
    %413 = vmatpush1.bf16.msra.mxu0 %v398
    %414 = vmatprep.subr.bf16.mxu0 0
    %415 = vmatpush1.bf16.msra.mxu0 0
    %416 = vmatprep.subr.bf16.mxu0 0
    %417 = vmatpush1.bf16.msra.mxu0 0
    %418 = vmatprep.subr.bf16.mxu0 0
    %419 = vmatpush1.bf16.msra.mxu0 0
    %420 = vmatprep.subr.bf16.mxu0 0
    %421 = vmatpush1.bf16.msra.mxu0 0
    %422 = vmatprep.subr.bf16.mxu0 0
    %423 = vmatpush1.bf16.msra.mxu0 0
    %424 = vmatprep.subr.bf16.mxu0 0
    %425 = vmatpush1.bf16.msra.mxu0 0
    %426 = vmatprep.subr.bf16.mxu0 0
    %427 = vmatpush1.bf16.msra.mxu0 0
    %428 = vmatprep.subr.bf16.mxu0 0
    %429 = vmatpush1.bf16.msra.mxu0 0
    %430 = vmatprep.subr.bf16.mxu0 0
    %431 = vmatpush1.bf16.msra.mxu0 0
    %432 = vmatprep.subr.bf16.mxu0 0
    %433 = vmatpush1.bf16.msra.mxu0 0
    %434 = vmatprep.subr.bf16.mxu0 0
    %435 = vmatpush1.bf16.msra.mxu0 0
    %436 = vmatprep.subr.bf16.mxu0 0
    %437 = vmatpush1.bf16.msra.mxu0 0
    %438 = vmatprep.mubr.bf16.mxu0 0
    %439 = vmatmul.mubr.bf16.gmra.mrb[0].mxu0 %v404
    %v440 = vpop.f32.mrb[0].mxu0
    %v441 = vadd.f32 %v377, %v440
    %v442 = vpop.f32.mrb[0].mxu0
    %v443 = vpop.f32.mrb[0].mxu0
    %v444 = vpop.f32.mrb[0].mxu0
    %445 = vdwg.mxu0
    %v446 = vmul.f32 %v441, 0.5
    %v447 = vmul.f32 %v446, 1.442695
    %v448 = vpow.pop %v447
    %450 = vrot.lane.b32.xlu0 %v448, 113
    %v451 = vpop.permute.xlu0 %450
    %v453 = vmul.f32 %v113, %v451
    %v454 = vadd.f32 %v441, %v453
    %v455 = vpack.c.bf16 %v454, %v454
    %v456 = vld [vmem:[%s10] sm:$0xf]
    %v457 = vld [vmem:[%s10 + $0x4] sm:$0xf]
    %v460 = vunpack.c.l.b16 %v456
    %v461 = vunpack.c.l.b16 %v457
    %v462 = vpack.c.b16 %v461, %v460
    %464 = vrot.lane.b32.xlu0 %v180, 64
    %v465 = vpop.permute.xlu0 %464
    %vm467 = vcmask 121856
    %v469 = vsel %vm467, %v455, 0
    %vm471 = vcmask 1046528
    %vm472 = vcmask 1047552
    %v473 = vsel %vm471, 4294967295, 65535
    %v474 = vsel %vm472, %v473, 0
    %v476 = vand.u32 %v462, %v474
    %478 = vmatprep.subr.bf16.mxu0 0
    %479 = vmatpush1.bf16.msra.mxu0 %v476
    %480 = vmatprep.subr.bf16.mxu0 0
    %481 = vmatpush1.bf16.msra.mxu0 0
    %482 = vmatprep.subr.bf16.mxu0 0
    %483 = vmatpush1.bf16.msra.mxu0 0
    %484 = vmatprep.subr.bf16.mxu0 0
    %485 = vmatpush1.bf16.msra.mxu0 0
    %486 = vmatprep.subr.bf16.mxu0 0
    %487 = vmatpush1.bf16.msra.mxu0 0
    %488 = vmatprep.subr.bf16.mxu0 0
    %489 = vmatpush1.bf16.msra.mxu0 0
    %490 = vmatprep.subr.bf16.mxu0 0
    %491 = vmatpush1.bf16.msra.mxu0 0
    %492 = vmatprep.subr.bf16.mxu0 0
    %493 = vmatpush1.bf16.msra.mxu0 0
    %494 = vmatprep.subr.bf16.mxu0 0
    %495 = vmatpush1.bf16.msra.mxu0 0
    %496 = vmatprep.subr.bf16.mxu0 0
    %497 = vmatpush1.bf16.msra.mxu0 0
    %498 = vmatprep.subr.bf16.mxu0 0
    %499 = vmatpush1.bf16.msra.mxu0 0
    %500 = vmatprep.subr.bf16.mxu0 0
    %501 = vmatpush1.bf16.msra.mxu0 0
    %502 = vmatprep.subr.bf16.mxu0 0
    %503 = vmatpush1.bf16.msra.mxu0 0
    %504 = vmatprep.subr.bf16.mxu0 0
    %505 = vmatpush1.bf16.msra.mxu0 0
    %506 = vmatprep.subr.bf16.mxu0 0
    %507 = vmatpush1.bf16.msra.mxu0 0
    %508 = vmatprep.subr.bf16.mxu0 0
    %509 = vmatpush1.bf16.msra.mxu0 0
    %510 = vmatprep.mubr.bf16.mxu0 0
    %511 = vmatmul.mubr.bf16.gmra.mrb[0].mxu0 %v469
    %v512 = vpop.f32.mrb[0].mxu0
    %v513 = vadd.f32 %v465, %v512
    %v514 = vpop.f32.mrb[0].mxu0
    %v515 = vpop.f32.mrb[0].mxu0
    %v516 = vpop.f32.mrb[0].mxu0
    %517 = vdwg.mxu0
    %v518 = vld [vmem:[#allocation6] sm:$0x1]
    %v520 = vlaneseq
    %v521 = vshrl.u32 %v520, 7
    %v522 = vsub.s32 0, %v521
    %v523 = vrot.slane %v518, %v522
    %v525 = vadd.f32 %v513, %v523
    %v526 = vmax.f32 %v525, 0.0
    %v527 = vpack.c.bf16 %v526, %v526
    %v528 = vld [vmem:[%s12] sm:$0xf]
    %v529 = vld [vmem:[%s12 + $0x4] sm:$0xf]
    %v530 = vld [vmem:[%s12 + $0x8] sm:$0xf]
    %v531 = vld [vmem:[%s12 + $0xc] sm:$0xf]
    %v532 = vld [vmem:[%s12 + $0x10] sm:$0xf]
    %v533 = vld [vmem:[%s12 + $0x14] sm:$0xf]
    %v534 = vld [vmem:[%s12 + $0x18] sm:$0xf]
    %v535 = vld [vmem:[%s12 + $0x1c] sm:$0xf]
    %v536 = vld [vmem:[#allocation7] sm:$0x1]
    %v538 = vlaneseq
    %v539 = vshrl.u32 %v538, 7
    %v540 = vsub.s32 0, %v539
    %v541 = vrot.slane %v536, %v540
    %v551 = vunpack.c.l.b16 %v528
    %v552 = vunpack.c.l.b16 %v529
    %v553 = vunpack.c.l.b16 %v530
    %v554 = vunpack.c.l.b16 %v531
    %v555 = vunpack.c.l.b16 %v532
    %v556 = vunpack.c.l.b16 %v533
    %v557 = vunpack.c.l.b16 %v534
    %v558 = vunpack.c.l.b16 %v535
    %v559 = vpack.c.b16 %v552, %v551
    %v560 = vpack.c.b16 %v554, %v553
    %v561 = vpack.c.b16 %v556, %v555
    %v562 = vpack.c.b16 %v558, %v557
    %v568 = vsel %vm234, %v527, 0
    %570 = vmatprep.subr.bf16.mxu0 0
    %571 = vmatpush1.bf16.msra.mxu0 %v559
    %572 = vmatprep.subr.bf16.mxu0 0
    %573 = vmatpush1.bf16.msra.mxu0 %v560
    %574 = vmatprep.subr.bf16.mxu0 0
    %575 = vmatpush1.bf16.msra.mxu0 %v561
    %576 = vmatprep.subr.bf16.mxu0 0
    %577 = vmatpush1.bf16.msra.mxu0 %v562
    %578 = vmatprep.subr.bf16.mxu0 0
    %579 = vmatpush1.bf16.msra.mxu0 0
    %580 = vmatprep.subr.bf16.mxu0 0
    %581 = vmatpush1.bf16.msra.mxu0 0
    %582 = vmatprep.subr.bf16.mxu0 0
    %583 = vmatpush1.bf16.msra.mxu0 0
    %584 = vmatprep.subr.bf16.mxu0 0
    %585 = vmatpush1.bf16.msra.mxu0 0
    %586 = vmatprep.subr.bf16.mxu0 0
    %587 = vmatpush1.bf16.msra.mxu0 0
    %588 = vmatprep.subr.bf16.mxu0 0
    %589 = vmatpush1.bf16.msra.mxu0 0
    %590 = vmatprep.subr.bf16.mxu0 0
    %591 = vmatpush1.bf16.msra.mxu0 0
    %592 = vmatprep.subr.bf16.mxu0 0
    %593 = vmatpush1.bf16.msra.mxu0 0
    %594 = vmatprep.subr.bf16.mxu0 0
    %595 = vmatpush1.bf16.msra.mxu0 0
    %596 = vmatprep.subr.bf16.mxu0 0
    %597 = vmatpush1.bf16.msra.mxu0 0
    %598 = vmatprep.subr.bf16.mxu0 0
    %599 = vmatpush1.bf16.msra.mxu0 0
    %600 = vmatprep.subr.bf16.mxu0 0
    %601 = vmatpush1.bf16.msra.mxu0 0
    %602 = vmatprep.mubr.bf16.mxu0 0
    %603 = vmatmul.mubr.bf16.gmra.mrb[0].mxu0 %v568
    %v604 = vpop.f32.mrb[0].mxu0
    %v605 = vadd.f32 %v541, %v604
    %v606 = vpop.f32.mrb[0].mxu0
    %v607 = vpop.f32.mrb[0].mxu0
    %v608 = vpop.f32.mrb[0].mxu0
    %609 = vdwg.mxu0
    %v610 = vmax.f32 %v605, 0.0
    %v611 = vpack.c.bf16 %v610, %v610
    %v612 = vld [vmem:[%s14] sm:$0xf]
    %v613 = vld [vmem:[%s14 + $0x4] sm:$0xf]
    %v614 = vld [vmem:[%s14 + $0x8] sm:$0xf]
    %v615 = vld [vmem:[%s14 + $0xc] sm:$0xf]
    %v616 = vld [vmem:[%s14 + $0x10] sm:$0xf]
    %v617 = vld [vmem:[%s14 + $0x14] sm:$0xf]
    %v618 = vld [vmem:[%s14 + $0x18] sm:$0xf]
    %v619 = vld [vmem:[%s14 + $0x1c] sm:$0xf]
    %v620 = vld [vmem:[#allocation9] sm:$0x1]
    %v622 = vlaneseq
    %v623 = vshrl.u32 %v622, 7
    %v624 = vsub.s32 0, %v623
    %v625 = vrot.slane %v620, %v624
    %v635 = vunpack.c.l.b16 %v612
    %v636 = vunpack.c.l.b16 %v613
    %v637 = vunpack.c.l.b16 %v614
    %v638 = vunpack.c.l.b16 %v615
    %v639 = vunpack.c.l.b16 %v616
    %v640 = vunpack.c.l.b16 %v617
    %v641 = vunpack.c.l.b16 %v618
    %v642 = vunpack.c.l.b16 %v619
    %v643 = vpack.c.b16 %v636, %v635
    %v644 = vpack.c.b16 %v638, %v637
    %v645 = vpack.c.b16 %v640, %v639
    %v646 = vpack.c.b16 %v642, %v641
    %v652 = vsel %vm234, %v611, 0
    %654 = vmatprep.subr.bf16.mxu0 0
    %655 = vmatpush1.bf16.msra.mxu0 %v643
    %656 = vmatprep.subr.bf16.mxu0 0
    %657 = vmatpush1.bf16.msra.mxu0 %v644
    %658 = vmatprep.subr.bf16.mxu0 0
    %659 = vmatpush1.bf16.msra.mxu0 %v645
    %660 = vmatprep.subr.bf16.mxu0 0
    %661 = vmatpush1.bf16.msra.mxu0 %v646
    %662 = vmatprep.subr.bf16.mxu0 0
    %663 = vmatpush1.bf16.msra.mxu0 0
    %664 = vmatprep.subr.bf16.mxu0 0
    %665 = vmatpush1.bf16.msra.mxu0 0
    %666 = vmatprep.subr.bf16.mxu0 0
    %667 = vmatpush1.bf16.msra.mxu0 0
    %668 = vmatprep.subr.bf16.mxu0 0
    %669 = vmatpush1.bf16.msra.mxu0 0
    %670 = vmatprep.subr.bf16.mxu0 0
    %671 = vmatpush1.bf16.msra.mxu0 0
    %672 = vmatprep.subr.bf16.mxu0 0
    %673 = vmatpush1.bf16.msra.mxu0 0
    %674 = vmatprep.subr.bf16.mxu0 0
    %675 = vmatpush1.bf16.msra.mxu0 0
    %676 = vmatprep.subr.bf16.mxu0 0
    %677 = vmatpush1.bf16.msra.mxu0 0
    %678 = vmatprep.subr.bf16.mxu0 0
    %679 = vmatpush1.bf16.msra.mxu0 0
    %680 = vmatprep.subr.bf16.mxu0 0
    %681 = vmatpush1.bf16.msra.mxu0 0
    %682 = vmatprep.subr.bf16.mxu0 0
    %683 = vmatpush1.bf16.msra.mxu0 0
    %684 = vmatprep.subr.bf16.mxu0 0
    %685 = vmatpush1.bf16.msra.mxu0 0
    %686 = vmatprep.mubr.bf16.mxu0 0
    %687 = vmatmul.mubr.bf16.gmra.mrb[0].mxu0 %v652
    %v688 = vpop.f32.mrb[0].mxu0
    %v689 = vadd.f32 %v625, %v688
    %v690 = vpop.f32.mrb[0].mxu0
    %v691 = vpop.f32.mrb[0].mxu0
    %v692 = vpop.f32.mrb[0].mxu0
    %693 = vdwg.mxu0
    %v694 = vxor.u32 %v689, 2147483648
    %v695 = vmul.f32 %v694, 1.442695
    %v696 = vpow.pop %v695
    %v697 = vadd.f32 %v696, 1.0
    %v698 = vrcp.pop %v697
    %v699 = vmul.f32 1.0, %v698
    %701 = vrot.lane.b32.xlu0 %v441, 32
    %v702 = vpop.permute.xlu0 %701
    %vm704 = vcmask 261120
    %v705 = vsel %vm704, %v699, %v702
    %vm706 = vcmask 506880
    %707 = vst.msk [vmem:[%s16] sm:$0xff] %vm706, %v705
    // Predicated region
    $region86: #{cvae_forward.1} parent=1 // pred_check
      _
    $region87: #{cvae_forward.1} parent=1 // pred_check_branch
      %709 = sbr.rel (0) target = $region89
    $region88: #{cvae_forward.1} parent=1 // pred_region
      _
    $region89: #{cvae_forward.1} parent=1 // pred_fallthru
      _
    // Predicated region
    $region90: #{cvae_forward.1} parent=1 // pred_check
      _
    $region91: #{cvae_forward.1} parent=1 // pred_check_branch
      %711 = sbr.rel (0) target = $region93
    $region92: #{cvae_forward.1} parent=1 // pred_region
      _
    $region93: #{cvae_forward.1} parent=1 // pred_fallthru
      _
    %712 = vsyncpa [#allocation3], 1
    %713 = vsyncpa [#allocation5], 1
    %714 = vsyncpa [#allocation8], 1

</llo_original>
